<compile_context>
chip_gen: v7x
topology: tpu7x:2x2x1
jax: 0.10.0
libtpu: 0.0.40
codegen_flags: <defaults>
</compile_context>

<pallas_src>
import functools

import jax
import jax.numpy as jnp
from jax.experimental import pallas as pl
from jax.experimental.pallas import tpu as pltpu


def _round_up(v, m):
    return (v + m - 1) // m * m


# --------------------------------------------------------------------------------------
# One-time parameter packing (call at init, reuse the result for every forward).
# --------------------------------------------------------------------------------------
def pack_style_mlp_params(weights, biases):
    """Pack StyleMLP params into contiguous padded device arrays (done ONCE).

    weights: list of (in_dim, out_dim) arrays (== torch weight.T), len >= 2
    biases:  list of (out_dim,) arrays
    Returns (w0_packed, w_rest_packed, b_packed, out_dim):
      w0_packed:     (style_dim, PAD)        f32  first layer, un-inflated K dim
      w_rest_packed: (n_layers-1, PAD, PAD)  bf16 remaining layers, zero padded
      b_packed:      (n_layers, 1, PAD)      f32  all biases, zero padded
    """
    n_layers = len(weights)
    assert n_layers >= 2, "StyleMLP always has at least 2 linear layers"
    style_dim = weights[0].shape[0]
    out_dims = [w.shape[1] for w in weights]
    PAD = _round_up(max(out_dims), 128)

    w0_packed = jnp.zeros((style_dim, PAD), jnp.float32)
    w0_packed = w0_packed.at[:, : out_dims[0]].set(weights[0].astype(jnp.float32))

    w_rest_packed = jnp.zeros((n_layers - 1, PAD, PAD), jnp.bfloat16)
    b_packed = jnp.zeros((n_layers, 1, PAD), jnp.float32)
    b_packed = b_packed.at[0, 0, : out_dims[0]].set(biases[0].astype(jnp.float32))
    for i in range(1, n_layers):
        di, do = weights[i].shape
        w_rest_packed = w_rest_packed.at[i - 1, :di, :do].set(
            weights[i].astype(jnp.bfloat16))
        b_packed = b_packed.at[i, 0, :do].set(biases[i].astype(jnp.float32))

    return w0_packed, w_rest_packed, b_packed, out_dims[-1]


# --------------------------------------------------------------------------------------
# Kernel: fused MLP over one (TILE_N, ...) batch tile; params are VMEM-resident.
# --------------------------------------------------------------------------------------
def _style_mlp_kernel(n_rest, x_ref, w0_ref, wr_ref, b_ref, out_ref):
    """
    x_ref:   (TILE_N, style_dim)       bf16  (un-inflated style code)
    w0_ref:  (style_dim, PAD)          f32   (resident)
    wr_ref:  (n_rest, PAD, PAD)        bf16  (resident)
    b_ref:   (n_layers, 1, PAD)        f32   (resident)
    out_ref: (TILE_N, PAD)             bf16  (lane-dense padded output)
    """
    # Layer 0: tiny-K matmul straight off the unpadded style code; f32 keeps the
    # shapes (8,128)-aligned and costs nothing at this size. ReLU in f32 on the VPU.
    acc = jnp.dot(x_ref[...].astype(jnp.float32), w0_ref[...],
                  preferred_element_type=jnp.float32)
    acc = jnp.maximum(acc + b_ref[0], 0.0)            # first layer always has ReLU
    h = acc.astype(jnp.bfloat16)

    # Layers 1 .. n_layers-1: bf16 operands on the MXU, f32 accumulation,
    # bias + ReLU in f32, one cast back to bf16 per layer. Last layer: no activation.
    for i in range(n_rest):
        acc = jnp.dot(h, wr_ref[i], preferred_element_type=jnp.float32) + b_ref[i + 1]
        if i < n_rest - 1:
            acc = jnp.maximum(acc, 0.0)
        h = acc.astype(jnp.bfloat16)

    out_ref[...] = h


# --------------------------------------------------------------------------------------
# Jitted forward wrapper.
# --------------------------------------------------------------------------------------
@functools.partial(jax.jit, static_argnames=("out_dim", "tile_n_max"))
def style_mlp_forward(x, w0_packed, w_rest_packed, b_packed, *, out_dim, tile_n_max=512):
    """x: (N, style_dim); packed params from pack_style_mlp_params()."""
    N, style_dim = x.shape
    sd_w, PAD = w0_packed.shape
    assert sd_w == style_dim, (sd_w, style_dim)
    n_rest = w_rest_packed.shape[0]
    n_layers = n_rest + 1

    # Row tiling: multiples of 16 (bf16 sublane tiling), cdiv grid with masked partial
    # tail tiles (no padded_N overshoot). Force >= 2 grid steps for N >= 32 so the
    # "parallel" axis shards across both TensorCores on v7x (harmless on v5e/v6e).
    TILE_N = min(tile_n_max, max(16, _round_up(N, 16)))
    if N >= 32:
        while pl.cdiv(N, TILE_N) < 2:
            TILE_N = _round_up(TILE_N // 2, 16)
    grid = (pl.cdiv(N, TILE_N),)

    # VMEM budget: double-buffered x/out tiles + resident params + live intermediates.
    vmem_bytes = (
        2 * TILE_N * 128 * 2                      # bf16 x tiles (lane-padded, x2 bufs)
        + 2 * TILE_N * PAD * 2                    # bf16 out tiles (x2 bufs)
        + 2 * _round_up(style_dim, 8) * PAD * 4   # resident f32 first-layer weight
        + 2 * n_rest * PAD * PAD * 2              # resident bf16 weights
        + 2 * n_layers * 8 * PAD * 4              # resident f32 biases (sublane-padded)
        + TILE_N * PAD * (4 + 4 + 2)              # live f32 x / f32 acc / bf16 h
    )
    vmem_limit = int(min(_round_up(vmem_bytes, 1 << 20) + (4 << 20), 100 << 20))

    # Advisory cost: report the padded work the kernel actually executes.
    padded_rows = grid[0] * TILE_N
    flops = 2 * padded_rows * (style_dim * PAD + n_rest * PAD * PAD)
    bytes_accessed = (N * style_dim * 2
                      + w0_packed.size * 4 + w_rest_packed.size * 2 + b_packed.size * 4
                      + N * PAD * 2)
    cost = pl.CostEstimate(flops=flops, transcendentals=0,
                           bytes_accessed=bytes_accessed)

    out_padded = pl.pallas_call(
        functools.partial(_style_mlp_kernel, n_rest),
        out_shape=jax.ShapeDtypeStruct((N, PAD), jnp.bfloat16),
        grid=grid,
        in_specs=[
            pl.BlockSpec((TILE_N, style_dim), lambda i: (i, 0)),        # bf16 x tile
            pl.BlockSpec((style_dim, PAD), lambda i: (0, 0)),           # resident w0
            pl.BlockSpec((n_rest, PAD, PAD), lambda i: (0, 0, 0)),      # resident w_rest
            pl.BlockSpec((n_layers, 1, PAD), lambda i: (0, 0, 0)),      # resident biases
        ],
        out_specs=pl.BlockSpec((TILE_N, PAD), lambda i: (i, 0)),
        compiler_params=pltpu.CompilerParams(
            dimension_semantics=("parallel",),
            vmem_limit_bytes=vmem_limit,
        ),
        cost_estimate=cost,
    )(x.astype(jnp.bfloat16), w0_packed, w_rest_packed, b_packed)

    # Lane-dense 128-wide slab -> lazy slice back to the logical width (fused under jit).
    return out_padded[:, :out_dim].astype(x.dtype)


# --------------------------------------------------------------------------------------
# Init + pure-JAX reference (for the correctness check).
# --------------------------------------------------------------------------------------
def init_style_mlp_params(key, n_mlp, style_dim, latent_dim, out_dim):
    """Deterministic init mimicking nn.Linear defaults (uniform +-1/sqrt(fan_in))."""
    dims = [style_dim] + [latent_dim] * (n_mlp - 1) + [out_dim]
    weights, biases = [], []
    for i in range(n_mlp):
        fan_in, fan_out = dims[i], dims[i + 1]
        key, kw, kb = jax.random.split(key, 3)
        bound = 1.0 / (fan_in ** 0.5)
        # stored as (in, out) == torch weight (out, in) transposed
        w = jax.random.uniform(kw, (fan_in, fan_out), jnp.float32, -bound, bound)
        b = jax.random.uniform(kb, (fan_out,), jnp.float32, -bound, bound)
        weights.append(w)
        biases.append(b)
    return weights, biases


def style_mlp_reference(x, weights, biases):
    """Pure-JAX f32 reference of the PyTorch forward."""
    h = x
    n = len(weights)
    for i, (w, b) in enumerate(zip(weights, biases)):
        h = h @ w + b
        if i < n - 1:
            h = jnp.maximum(h, 0.0)
    return h


if __name__ == "__main__":
    # Small shapes consistent with StyleMLP's forward: x is (batch, style_dim).
    n_mlp = 4
    style_dim = 8
    latent_dim = 32
    out_dim = 16
    batch = 2

    key = jax.random.PRNGKey(0)
    key, kx = jax.random.split(key)
    x = jax.random.normal(kx, (batch, style_dim), jnp.float32)

    weights, biases = init_style_mlp_params(key, n_mlp, style_dim, latent_dim, out_dim)

    # Pack parameters ONCE at init; the forward reuses the packed arrays.
    w0_p, wr_p, b_p, packed_out_dim = pack_style_mlp_params(weights, biases)

    out = style_mlp_forward(x, w0_p, wr_p, b_p, out_dim=packed_out_dim)
    out = jax.block_until_ready(out)

    ref = style_mlp_reference(x, weights, biases)
    assert out.shape == (batch, out_dim), out.shape
    # bf16 MXU operands / bf16 inter-layer h (f32 accumulation) vs f32 reference.
    assert jnp.allclose(out, ref, atol=5e-2, rtol=5e-2), "mismatch vs reference"

    # Also exercise the multi-tile path (grid > 1) with a masked partial tail tile.
    x2 = jax.random.normal(jax.random.PRNGKey(1), (40, style_dim), jnp.float32)
    out2 = jax.block_until_ready(
        style_mlp_forward(x2, w0_p, wr_p, b_p, out_dim=packed_out_dim))
    ref2 = style_mlp_reference(x2, weights, biases)
    assert out2.shape == (40, out_dim), out2.shape
    assert jnp.allclose(out2, ref2, atol=5e-2, rtol=5e-2), "mismatch vs reference (N=40)"

    print("KERNEL_OK")
</pallas_src>

<mosaic_0001>
module attributes {stable_mosaic.version = 11 : i64} {
  func.func @_style_mlp_kernel(%arg0: i32, %arg1: memref<16x8xbf16, #tpu.memory_space<vmem>>, %arg2: memref<8x128xf32, #tpu.memory_space<vmem>>, %arg3: memref<3x128x128xbf16, #tpu.memory_space<vmem>>, %arg4: memref<4x1x128xf32, #tpu.memory_space<vmem>>, %arg5: memref<16x128xbf16, #tpu.memory_space<vmem>>) attributes {dimension_semantics = [#tpu.dimension_semantics<parallel>], iteration_bounds = array<i64: 1>, scalar_prefetch = 0 : i64, scratch_operands = 0 : i64, tpu.core_type = #tpu.core_type<tc>, window_params = [{transform_indices = @transform_0, window_bounds = array<i64: 16, 8>}, {pipeline_mode = #tpu.pipeline_mode<synchronous>, transform_indices = @transform_1, window_bounds = array<i64: 8, 128>}, {pipeline_mode = #tpu.pipeline_mode<synchronous>, transform_indices = @transform_2, window_bounds = array<i64: 3, 128, 128>}, {pipeline_mode = #tpu.pipeline_mode<synchronous>, transform_indices = @transform_3, window_bounds = array<i64: 4, 1, 128>}, {transform_indices = @transform_4, window_bounds = array<i64: 16, 128>}]} {
    %c0 = arith.constant 0 : index
    %c0_0 = arith.constant 0 : index
    %0 = vector.load %arg1[%c0, %c0_0] : memref<16x8xbf16, #tpu.memory_space<vmem>>, vector<16x8xbf16>
    %1 = arith.extf %0 : vector<16x8xbf16> to vector<16x8xf32>
    %c0_1 = arith.constant 0 : index
    %c0_2 = arith.constant 0 : index
    %2 = vector.load %arg2[%c0_1, %c0_2] : memref<8x128xf32, #tpu.memory_space<vmem>>, vector<8x128xf32>
    %cst = arith.constant dense<0.000000e+00> : vector<16x128xf32>
    %3 = tpu.matmul %1, %2, %cst {dimension_numbers = #tpu.dot_dimension_numbers<[1], [0], [0], [1], [0, 0, 1, 1], [], []>} : vector<16x8xf32>, vector<8x128xf32>, vector<16x128xf32> -> vector<16x128xf32>
    %c0_3 = arith.constant 0 : index
    %c0_4 = arith.constant 0 : index
    %c0_5 = arith.constant 0 : index
    %4 = vector.load %arg4[%c0_3, %c0_4, %c0_5] : memref<4x1x128xf32, #tpu.memory_space<vmem>>, vector<1x1x128xf32>
    %5 = vector.shape_cast %4 : vector<1x1x128xf32> to vector<1x128xf32>
    %6 = vector.broadcast %5 : vector<1x128xf32> to vector<16x128xf32>
    %7 = arith.addf %3, %6 : vector<16x128xf32>
    %cst_6 = arith.constant 0.000000e+00 : f32
    %8 = vector.broadcast %cst_6 : f32 to vector<16x128xf32>
    %9 = arith.maximumf %7, %8 : vector<16x128xf32>
    %10 = arith.truncf %9 : vector<16x128xf32> to vector<16x128xbf16>
    %c0_7 = arith.constant 0 : index
    %c0_8 = arith.constant 0 : index
    %c0_9 = arith.constant 0 : index
    %11 = vector.load %arg3[%c0_7, %c0_8, %c0_9] : memref<3x128x128xbf16, #tpu.memory_space<vmem>>, vector<1x128x128xbf16>
    %12 = vector.shape_cast %11 : vector<1x128x128xbf16> to vector<128x128xbf16>
    %cst_10 = arith.constant dense<0.000000e+00> : vector<16x128xf32>
    %13 = tpu.matmul %10, %12, %cst_10 {dimension_numbers = #tpu.dot_dimension_numbers<[1], [0], [0], [1], [0, 0, 1, 1], [], []>} : vector<16x128xbf16>, vector<128x128xbf16>, vector<16x128xf32> -> vector<16x128xf32>
    %c1 = arith.constant 1 : index
    %c0_11 = arith.constant 0 : index
    %c0_12 = arith.constant 0 : index
    %14 = vector.load %arg4[%c1, %c0_11, %c0_12] : memref<4x1x128xf32, #tpu.memory_space<vmem>>, vector<1x1x128xf32>
    %15 = vector.shape_cast %14 : vector<1x1x128xf32> to vector<1x128xf32>
    %16 = vector.broadcast %15 : vector<1x128xf32> to vector<16x128xf32>
    %17 = arith.addf %13, %16 : vector<16x128xf32>
    %cst_13 = arith.constant 0.000000e+00 : f32
    %18 = vector.broadcast %cst_13 : f32 to vector<16x128xf32>
    %19 = arith.maximumf %17, %18 : vector<16x128xf32>
    %20 = arith.truncf %19 : vector<16x128xf32> to vector<16x128xbf16>
    %c1_14 = arith.constant 1 : index
    %c0_15 = arith.constant 0 : index
    %c0_16 = arith.constant 0 : index
    %21 = vector.load %arg3[%c1_14, %c0_15, %c0_16] : memref<3x128x128xbf16, #tpu.memory_space<vmem>>, vector<1x128x128xbf16>
    %22 = vector.shape_cast %21 : vector<1x128x128xbf16> to vector<128x128xbf16>
    %cst_17 = arith.constant dense<0.000000e+00> : vector<16x128xf32>
    %23 = tpu.matmul %20, %22, %cst_17 {dimension_numbers = #tpu.dot_dimension_numbers<[1], [0], [0], [1], [0, 0, 1, 1], [], []>} : vector<16x128xbf16>, vector<128x128xbf16>, vector<16x128xf32> -> vector<16x128xf32>
    %c2 = arith.constant 2 : index
    %c0_18 = arith.constant 0 : index
    %c0_19 = arith.constant 0 : index
    %24 = vector.load %arg4[%c2, %c0_18, %c0_19] : memref<4x1x128xf32, #tpu.memory_space<vmem>>, vector<1x1x128xf32>
    %25 = vector.shape_cast %24 : vector<1x1x128xf32> to vector<1x128xf32>
    %26 = vector.broadcast %25 : vector<1x128xf32> to vector<16x128xf32>
    %27 = arith.addf %23, %26 : vector<16x128xf32>
    %cst_20 = arith.constant 0.000000e+00 : f32
    %28 = vector.broadcast %cst_20 : f32 to vector<16x128xf32>
    %29 = arith.maximumf %27, %28 : vector<16x128xf32>
    %30 = arith.truncf %29 : vector<16x128xf32> to vector<16x128xbf16>
    %c2_21 = arith.constant 2 : index
    %c0_22 = arith.constant 0 : index
    %c0_23 = arith.constant 0 : index
    %31 = vector.load %arg3[%c2_21, %c0_22, %c0_23] : memref<3x128x128xbf16, #tpu.memory_space<vmem>>, vector<1x128x128xbf16>
    %32 = vector.shape_cast %31 : vector<1x128x128xbf16> to vector<128x128xbf16>
    %cst_24 = arith.constant dense<0.000000e+00> : vector<16x128xf32>
    %33 = tpu.matmul %30, %32, %cst_24 {dimension_numbers = #tpu.dot_dimension_numbers<[1], [0], [0], [1], [0, 0, 1, 1], [], []>} : vector<16x128xbf16>, vector<128x128xbf16>, vector<16x128xf32> -> vector<16x128xf32>
    %c3 = arith.constant 3 : index
    %c0_25 = arith.constant 0 : index
    %c0_26 = arith.constant 0 : index
    %34 = vector.load %arg4[%c3, %c0_25, %c0_26] : memref<4x1x128xf32, #tpu.memory_space<vmem>>, vector<1x1x128xf32>
    %35 = vector.shape_cast %34 : vector<1x1x128xf32> to vector<1x128xf32>
    %36 = vector.broadcast %35 : vector<1x128xf32> to vector<16x128xf32>
    %37 = arith.addf %33, %36 : vector<16x128xf32>
    %38 = arith.truncf %37 : vector<16x128xf32> to vector<16x128xbf16>
    %c0_27 = arith.constant 0 : index
    %c0_28 = arith.constant 0 : index
    %39 = vector.load %arg5[%c0_27, %c0_28] : memref<16x128xbf16, #tpu.memory_space<vmem>>, vector<16x128xbf16>
    tpu.vector_store %arg5[%c0_27, %c0_28], %38 {strides = array<i32>} : memref<16x128xbf16, #tpu.memory_space<vmem>>, vector<16x128xbf16>,
    return
  }
  func.func @transform_0(%arg0: i32) -> (i32, i32) {
    %c0_i32 = arith.constant 0 : i32
    %c0_i32_0 = arith.constant 0 : i32
    return %arg0, %c0_i32 : i32, i32
  }
  func.func @transform_1(%arg0: i32) -> (i32, i32) {
    %c0_i32 = arith.constant 0 : i32
    %c0_i32_0 = arith.constant 0 : i32
    %c0_i32_1 = arith.constant 0 : i32
    return %c0_i32, %c0_i32_0 : i32, i32
  }
  func.func @transform_2(%arg0: i32) -> (i32, i32, i32) {
    %c0_i32 = arith.constant 0 : i32
    %c0_i32_0 = arith.constant 0 : i32
    %c0_i32_1 = arith.constant 0 : i32
    %c0_i32_2 = arith.constant 0 : i32
    return %c0_i32, %c0_i32_0, %c0_i32_1 : i32, i32, i32
  }
  func.func @transform_3(%arg0: i32) -> (i32, i32, i32) {
    %c0_i32 = arith.constant 0 : i32
    %c0_i32_0 = arith.constant 0 : i32
    %c0_i32_1 = arith.constant 0 : i32
    %c0_i32_2 = arith.constant 0 : i32
    return %c0_i32, %c0_i32_0, %c0_i32_1 : i32, i32, i32
  }
  func.func @transform_4(%arg0: i32) -> (i32, i32) {
    %c0_i32 = arith.constant 0 : i32
    %c0_i32_0 = arith.constant 0 : i32
    return %arg0, %c0_i32 : i32, i32
  }
}

</mosaic_0001>

<llo_original>
// kernel: style_mlp_forward.1
$region0: #{style_mlp_forward.1}
  #allocation0 [shape = 'u32[]', space=smem, size = 0x4, offset = 0x4, fixed_abs, tag = 'smem constant byte address 0x4 - core index']
  #allocation1 [shape = 'u32[144,128]{1,0:T(1,128)}', space=vmem, size = 0x12000, scoped, tag = 'internal scratch']
  %s0 = inlined_call_operand.vmem [shape: bf16[2,8], index: 0, kind: input, shape index: {}]
  %s1 = inlined_call_operand.hbm [shape: f32[8,128], index: 1, kind: input, shape index: {}]
  %s2 = inlined_call_operand.hbm [shape: bf16[3,128,128], index: 2, kind: input, shape index: {}]
  %s3 = inlined_call_operand.vmem [shape: f32[4,1,128], index: 3, kind: input, shape index: {}]
  %s4 = inlined_call_operand.vmem [shape: bf16[2,128], index: 4, kind: output, shape index: {}]
  %s5 = sld [smem:[#allocation0]]
  $region64: #{style_mlp_forward.1} parent=0
    _
  %s7 = ssub.s32 1, %s5
  %s8 = scalar_select 0, %s7, %s5
  $region1: #{style_mlp_forward.1} parent=0
    #allocation2 [shape = 'u8[4096]{0}', space=vmem, size = 0x1000, scoped, tag = 'input window, operand 1, single buffered']
    #allocation3 [shape = 's32[1]{0}', space=sflag, size = 0x4, scoped, tag = 'scoped memory for style_mlp_forward.1']
    #allocation4 [shape = 'u8[98304]{0}', space=vmem, size = 0x18000, scoped, tag = 'input window, operand 2, single buffered']
    #allocation5 [shape = 's32[1]{0}', space=sflag, size = 0x4, scoped, tag = 'scoped memory for style_mlp_forward.1']
    #allocation6 [shape = 'u8[4096]{0}', space=vmem, size = 0x1000, scoped, tag = 'output window, operand 0, single buffered']
    %9 = vsyncpa [#allocation3], 0
    %10 = vsyncpa [#allocation5], 0
    // Predicated region
    $region2: #{style_mlp_forward.1} parent=1 // pred_check
      _
    $region3: #{style_mlp_forward.1} parent=1 // pred_check_branch
      %12 = sbr.rel (0) target = $region5
    $region4: #{style_mlp_forward.1} parent=1 // pred_region
      _
    $region5: #{style_mlp_forward.1} parent=1 // pred_fallthru
      _
    // Predicated region
    $region6: #{style_mlp_forward.1} parent=1 // pred_check
      _
    $region7: #{style_mlp_forward.1} parent=1 // pred_check_branch
      %14 = sbr.rel (0) target = $region9
    $region8: #{style_mlp_forward.1} parent=1 // pred_region
      %s16 = ssub.s32 128, 128
      %17 = vsyncadd [#allocation3], %s16
      %s19 = sshll.u32 [#allocation2], 4
      %s20 = int_to_ptr.vmem [resolvable:$true] %s19
      %22 = dma.hbm_to_vmem [thread:$0]  %s1, 128, %s20, [#allocation3]
    $region9: #{style_mlp_forward.1} parent=1 // pred_fallthru
      _
    // Predicated region
    $region10: #{style_mlp_forward.1} parent=1 // pred_check
      _
    $region11: #{style_mlp_forward.1} parent=1 // pred_check_branch
      %24 = sbr.rel (0) target = $region13
    $region12: #{style_mlp_forward.1} parent=1 // pred_region
      %s26 = ssub.s32 3072, 3072
      %27 = vsyncadd [#allocation5], %s26
      %s28 = sshll.u32 [#allocation4], 4
      %s29 = int_to_ptr.vmem [resolvable:$true] %s28
      %34 = dma.hbm_to_vmem [thread:$0]  %s2, 3072, %s29, [#allocation5], 64, 64, 4
    $region13: #{style_mlp_forward.1} parent=1 // pred_fallthru
      _
    // Predicated region
    $region14: #{style_mlp_forward.1} parent=1 // pred_check
      _
    $region15: #{style_mlp_forward.1} parent=1 // pred_check_branch
      %36 = sbr.rel (0) target = $region17
    $region16: #{style_mlp_forward.1} parent=1 // pred_region
      _
    $region17: #{style_mlp_forward.1} parent=1 // pred_fallthru
      _
    // Predicated region
    $region18: #{style_mlp_forward.1} parent=1 // pred_check
      _
    $region19: #{style_mlp_forward.1} parent=1 // pred_check_branch
      %38 = sbr.rel (0) target = $region21
    $region20: #{style_mlp_forward.1} parent=1 // pred_region
      %39 = dma.done [#allocation3], 128
    $region21: #{style_mlp_forward.1} parent=1 // pred_fallthru
      _
    // Predicated region
    $region22: #{style_mlp_forward.1} parent=1 // pred_check
      _
    $region23: #{style_mlp_forward.1} parent=1 // pred_check_branch
      %41 = sbr.rel (0) target = $region25
    $region24: #{style_mlp_forward.1} parent=1 // pred_region
      %42 = dma.done [#allocation5], 3072
    $region25: #{style_mlp_forward.1} parent=1 // pred_fallthru
      _
    %v44 = vld [vmem:[%s0] sm:$0x1]
    %v45 = vld [vmem:[%s0 + $0x1] sm:$0x1]
    %v46 = vld [vmem:[%s0 + $0x2] sm:$0x1]
    %v47 = vld [vmem:[%s0 + $0x3] sm:$0x1]
    %v48 = vld [vmem:[%s0 + $0x4] sm:$0x1]
    %v49 = vld [vmem:[%s0 + $0x5] sm:$0x1]
    %v50 = vld [vmem:[%s0 + $0x6] sm:$0x1]
    %v51 = vld [vmem:[%s0 + $0x7] sm:$0x1]
    %v52 = vunpack.c.l.bf16 %v44
    %v53 = vunpack.c.l.bf16 %v45
    %v54 = vunpack.c.l.bf16 %v46
    %v55 = vunpack.c.l.bf16 %v47
    %v56 = vunpack.c.l.bf16 %v48
    %v57 = vunpack.c.l.bf16 %v49
    %v58 = vunpack.c.l.bf16 %v50
    %v59 = vunpack.c.l.bf16 %v51
    %v60 = vld [vmem:[#allocation2] sm:$0xff]
    %v61 = vld [vmem:[%s3] sm:$0x1]
    %v63 = vlaneseq
    %v64 = vshrl.u32 %v63, 7
    %v65 = vsub.s32 0, %v64
    %v66 = vrot.slane %v61, %v65
    %v76 = vcombine.low %v52, %v53
    %v77 = vcombine.low %v54, %v55
    %v79 = vunpack.c.l.s4 1983009808
    %v80 = vunpack.c.0.s8 %v79
    %v81 = vlaneseq
    %v82 = vshrl.u32 %v81, 7
    %v83 = vsub.s32 %v80, %v82
    %v84 = vrot.slane %v76, %v83
    %v86 = vunpack.c.l.s4 1983009808
    %v87 = vunpack.c.0.s8 %v86
    %v88 = vlaneseq
    %v89 = vshrl.u32 %v88, 7
    %v90 = vsub.s32 %v87, %v89
    %v91 = vrot.slane %v77, %v90
    %v92 = vcombine.low %v84, %v91
    %v93 = vcombine.low %v56, %v57
    %v94 = vcombine.low %v58, %v59
    %v96 = vunpack.c.l.s4 1983009808
    %v97 = vunpack.c.0.s8 %v96
    %v98 = vlaneseq
    %v99 = vshrl.u32 %v98, 7
    %v100 = vsub.s32 %v97, %v99
    %v101 = vrot.slane %v93, %v100
    %v103 = vunpack.c.l.s4 1983009808
    %v104 = vunpack.c.0.s8 %v103
    %v105 = vlaneseq
    %v106 = vshrl.u32 %v105, 7
    %v107 = vsub.s32 %v104, %v106
    %v108 = vrot.slane %v94, %v107
    %v109 = vcombine.low %v101, %v108
    %vm110 = vcmask 64512
    %v111 = vsel %vm110, %v92, 0
    %v113 = vsel %vm110, %v109, 0
    %115 = vmatprep.subr.mxu0 0.0
    %116 = vmatpush1.msra.mxu0 %v60
    %117 = vmatprep.subr.mxu0 0.0
    %118 = vmatpush1.msra.mxu0 0.0
    %119 = vmatprep.subr.mxu0 0.0
    %120 = vmatpush1.msra.mxu0 0.0
    %121 = vmatprep.subr.mxu0 0.0
    %122 = vmatpush1.msra.mxu0 0.0
    %123 = vmatprep.subr.mxu0 0.0
    %124 = vmatpush1.msra.mxu0 0.0
    %125 = vmatprep.subr.mxu0 0.0
    %126 = vmatpush1.msra.mxu0 0.0
    %127 = vmatprep.subr.mxu0 0.0
    %128 = vmatpush1.msra.mxu0 0.0
    %129 = vmatprep.subr.mxu0 0.0
    %130 = vmatpush1.msra.mxu0 0.0
    %131 = vmatprep.subr.mxu0 0.0
    %132 = vmatpush1.msra.mxu0 0.0
    %133 = vmatprep.subr.mxu0 0.0
    %134 = vmatpush1.msra.mxu0 0.0
    %135 = vmatprep.subr.mxu0 0.0
    %136 = vmatpush1.msra.mxu0 0.0
    %137 = vmatprep.subr.mxu0 0.0
    %138 = vmatpush1.msra.mxu0 0.0
    %139 = vmatprep.subr.mxu0 0.0
    %140 = vmatpush1.msra.mxu0 0.0
    %141 = vmatprep.subr.mxu0 0.0
    %142 = vmatpush1.msra.mxu0 0.0
    %143 = vmatprep.subr.mxu0 0.0
    %144 = vmatpush1.msra.mxu0 0.0
    %145 = vmatprep.subr.mxu0 0.0
    %146 = vmatpush1.msra.mxu0 0.0
    %147 = vmatprep.subr.mxu0 0.0
    %148 = vmatpush1.msra.mxu0 0.0
    %149 = vmatprep.subr.mxu0 0.0
    %150 = vmatpush1.msra.mxu0 0.0
    %151 = vmatprep.subr.mxu0 0.0
    %152 = vmatpush1.msra.mxu0 0.0
    %153 = vmatprep.subr.mxu0 0.0
    %154 = vmatpush1.msra.mxu0 0.0
    %155 = vmatprep.subr.mxu0 0.0
    %156 = vmatpush1.msra.mxu0 0.0
    %157 = vmatprep.subr.mxu0 0.0
    %158 = vmatpush1.msra.mxu0 0.0
    %159 = vmatprep.subr.mxu0 0.0
    %160 = vmatpush1.msra.mxu0 0.0
    %161 = vmatprep.subr.mxu0 0.0
    %162 = vmatpush1.msra.mxu0 0.0
    %163 = vmatprep.subr.mxu0 0.0
    %164 = vmatpush1.msra.mxu0 0.0
    %165 = vmatprep.subr.mxu0 0.0
    %166 = vmatpush1.msra.mxu0 0.0
    %167 = vmatprep.subr.mxu0 0.0
    %168 = vmatpush1.msra.mxu0 0.0
    %169 = vmatprep.subr.mxu0 0.0
    %170 = vmatpush1.msra.mxu0 0.0
    %171 = vmatprep.subr.mxu0 0.0
    %172 = vmatpush1.msra.mxu0 0.0
    %173 = vmatprep.subr.mxu0 0.0
    %174 = vmatpush1.msra.mxu0 0.0
    %175 = vmatprep.subr.mxu0 0.0
    %176 = vmatpush1.msra.mxu0 0.0
    %177 = vmatprep.subr.mxu0 0.0
    %178 = vmatpush1.msra.mxu0 0.0
    %179 = vmatprep.mubr.f32.mxu0 0.0
    %180 = vmatmul.mubr.f32.gmra.mrb[0].mxu0 %v111
    %v181 = vpop.f32.mrb[0].mxu0
    %v182 = vadd.f32 %v66, %v181
    %v183 = vpop.f32.mrb[0].mxu0
    %184 = vmatprep.mubr.f32.mxu0 0.0
    %185 = vmatmul.mubr.f32.gmra.mrb[0].mxu0 %v113
    %v186 = vpop.f32.mrb[0].mxu0
    %v187 = vadd.f32 %v66, %v186
    %v188 = vpop.f32.mrb[0].mxu0
    %189 = vdwg.mxu0
    %v190 = vmax.f32 %v182, 0.0
    %v191 = vmax.f32 %v187, 0.0
    %v192 = vpack.c.bf16 %v191, %v190
    %v193 = vld [vmem:[#allocation4] sm:$0xf]
    %v194 = vld [vmem:[#allocation4 + $0x4] sm:$0xf]
    %v195 = vld [vmem:[#allocation4 + $0x8] sm:$0xf]
    %v196 = vld [vmem:[#allocation4 + $0xc] sm:$0xf]
    %v197 = vld [vmem:[#allocation4 + $0x10] sm:$0xf]
    %v198 = vld [vmem:[#allocation4 + $0x14] sm:$0xf]
    %v199 = vld [vmem:[#allocation4 + $0x18] sm:$0xf]
    %v200 = vld [vmem:[#allocation4 + $0x1c] sm:$0xf]
    %v201 = vld [vmem:[#allocation4 + $0x20] sm:$0xf]
    %v202 = vld [vmem:[#allocation4 + $0x24] sm:$0xf]
    %v203 = vld [vmem:[#allocation4 + $0x28] sm:$0xf]
    %v204 = vld [vmem:[#allocation4 + $0x2c] sm:$0xf]
    %v205 = vld [vmem:[#allocation4 + $0x30] sm:$0xf]
    %v206 = vld [vmem:[#allocation4 + $0x34] sm:$0xf]
    %v207 = vld [vmem:[#allocation4 + $0x38] sm:$0xf]
    %v208 = vld [vmem:[#allocation4 + $0x3c] sm:$0xf]
    %s209 = scalar_lea.vmem %s3, 1
    %v210 = vld [vmem:[%s209] sm:$0x1]
    %v212 = vlaneseq
    %v213 = vshrl.u32 %v212, 7
    %v214 = vsub.s32 0, %v213
    %v215 = vrot.slane %v210, %v214
    %v233 = vunpack.c.l.b16 %v193
    %v234 = vunpack.c.l.b16 %v194
    %v235 = vunpack.c.l.b16 %v195
    %v236 = vunpack.c.l.b16 %v196
    %v237 = vunpack.c.l.b16 %v197
    %v238 = vunpack.c.l.b16 %v198
    %v239 = vunpack.c.l.b16 %v199
    %v240 = vunpack.c.l.b16 %v200
    %v241 = vunpack.c.l.b16 %v201
    %v242 = vunpack.c.l.b16 %v202
    %v243 = vunpack.c.l.b16 %v203
    %v244 = vunpack.c.l.b16 %v204
    %v245 = vunpack.c.l.b16 %v205
    %v246 = vunpack.c.l.b16 %v206
    %v247 = vunpack.c.l.b16 %v207
    %v248 = vunpack.c.l.b16 %v208
    %v249 = vpack.c.b16 %v234, %v233
    %v250 = vpack.c.b16 %v236, %v235
    %v251 = vpack.c.b16 %v238, %v237
    %v252 = vpack.c.b16 %v240, %v239
    %v253 = vpack.c.b16 %v242, %v241
    %v254 = vpack.c.b16 %v244, %v243
    %v255 = vpack.c.b16 %v246, %v245
    %v256 = vpack.c.b16 %v248, %v247
    %265 = vmatprep.subr.bf16.mxu0 0
    %266 = vmatpush1.bf16.msra.mxu0 %v249
    %267 = vmatprep.subr.bf16.mxu0 0
    %268 = vmatpush1.bf16.msra.mxu0 %v250
    %269 = vmatprep.subr.bf16.mxu0 0
    %270 = vmatpush1.bf16.msra.mxu0 %v251
    %271 = vmatprep.subr.bf16.mxu0 0
    %272 = vmatpush1.bf16.msra.mxu0 %v252
    %273 = vmatprep.subr.bf16.mxu0 0
    %274 = vmatpush1.bf16.msra.mxu0 %v253
    %275 = vmatprep.subr.bf16.mxu0 0
    %276 = vmatpush1.bf16.msra.mxu0 %v254
    %277 = vmatprep.subr.bf16.mxu0 0
    %278 = vmatpush1.bf16.msra.mxu0 %v255
    %279 = vmatprep.subr.bf16.mxu0 0
    %280 = vmatpush1.bf16.msra.mxu0 %v256
    %281 = vmatprep.subr.bf16.mxu0 0
    %282 = vmatpush1.bf16.msra.mxu0 0
    %283 = vmatprep.subr.bf16.mxu0 0
    %284 = vmatpush1.bf16.msra.mxu0 0
    %285 = vmatprep.subr.bf16.mxu0 0
    %286 = vmatpush1.bf16.msra.mxu0 0
    %287 = vmatprep.subr.bf16.mxu0 0
    %288 = vmatpush1.bf16.msra.mxu0 0
    %289 = vmatprep.subr.bf16.mxu0 0
    %290 = vmatpush1.bf16.msra.mxu0 0
    %291 = vmatprep.subr.bf16.mxu0 0
    %292 = vmatpush1.bf16.msra.mxu0 0
    %293 = vmatprep.subr.bf16.mxu0 0
    %294 = vmatpush1.bf16.msra.mxu0 0
    %295 = vmatprep.subr.bf16.mxu0 0
    %296 = vmatpush1.bf16.msra.mxu0 0
    %297 = vmatprep.mubr.bf16.mxu0 0
    %298 = vmatmul.mubr.bf16.gmra.mrb[0].mxu0 %v192
    %v299 = vpop.f32.mrb[0].mxu0
    %v300 = vadd.f32 %v215, %v299
    %v301 = vpop.f32.mrb[0].mxu0
    %v302 = vpop.f32.mrb[0].mxu0
    %v303 = vadd.f32 %v215, %v302
    %v304 = vpop.f32.mrb[0].mxu0
    %305 = vdwg.mxu0
    %v306 = vmax.f32 %v300, 0.0
    %v307 = vmax.f32 %v303, 0.0
    %v308 = vpack.c.bf16 %v307, %v306
    %s309 = scalar_lea.vmem [#allocation4], 64
    %v310 = vld [vmem:[%s309] sm:$0xf]
    %v311 = vld [vmem:[%s309 + $0x4] sm:$0xf]
    %v312 = vld [vmem:[%s309 + $0x8] sm:$0xf]
    %v313 = vld [vmem:[%s309 + $0xc] sm:$0xf]
    %v314 = vld [vmem:[%s309 + $0x10] sm:$0xf]
    %v315 = vld [vmem:[%s309 + $0x14] sm:$0xf]
    %v316 = vld [vmem:[%s309 + $0x18] sm:$0xf]
    %v317 = vld [vmem:[%s309 + $0x1c] sm:$0xf]
    %v318 = vld [vmem:[%s309 + $0x20] sm:$0xf]
    %v319 = vld [vmem:[%s309 + $0x24] sm:$0xf]
    %v320 = vld [vmem:[%s309 + $0x28] sm:$0xf]
    %v321 = vld [vmem:[%s309 + $0x2c] sm:$0xf]
    %v322 = vld [vmem:[%s309 + $0x30] sm:$0xf]
    %v323 = vld [vmem:[%s309 + $0x34] sm:$0xf]
    %v324 = vld [vmem:[%s309 + $0x38] sm:$0xf]
    %v325 = vld [vmem:[%s309 + $0x3c] sm:$0xf]
    %s326 = scalar_lea.vmem %s3, 2
    %v327 = vld [vmem:[%s326] sm:$0x1]
    %v329 = vlaneseq
    %v330 = vshrl.u32 %v329, 7
    %v331 = vsub.s32 0, %v330
    %v332 = vrot.slane %v327, %v331
    %v350 = vunpack.c.l.b16 %v310
    %v351 = vunpack.c.l.b16 %v311
    %v352 = vunpack.c.l.b16 %v312
    %v353 = vunpack.c.l.b16 %v313
    %v354 = vunpack.c.l.b16 %v314
    %v355 = vunpack.c.l.b16 %v315
    %v356 = vunpack.c.l.b16 %v316
    %v357 = vunpack.c.l.b16 %v317
    %v358 = vunpack.c.l.b16 %v318
    %v359 = vunpack.c.l.b16 %v319
    %v360 = vunpack.c.l.b16 %v320
    %v361 = vunpack.c.l.b16 %v321
    %v362 = vunpack.c.l.b16 %v322
    %v363 = vunpack.c.l.b16 %v323
    %v364 = vunpack.c.l.b16 %v324
    %v365 = vunpack.c.l.b16 %v325
    %v366 = vpack.c.b16 %v351, %v350
    %v367 = vpack.c.b16 %v353, %v352
    %v368 = vpack.c.b16 %v355, %v354
    %v369 = vpack.c.b16 %v357, %v356
    %v370 = vpack.c.b16 %v359, %v358
    %v371 = vpack.c.b16 %v361, %v360
    %v372 = vpack.c.b16 %v363, %v362
    %v373 = vpack.c.b16 %v365, %v364
    %382 = vmatprep.subr.bf16.mxu0 0
    %383 = vmatpush1.bf16.msra.mxu0 %v366
    %384 = vmatprep.subr.bf16.mxu0 0
    %385 = vmatpush1.bf16.msra.mxu0 %v367
    %386 = vmatprep.subr.bf16.mxu0 0
    %387 = vmatpush1.bf16.msra.mxu0 %v368
    %388 = vmatprep.subr.bf16.mxu0 0
    %389 = vmatpush1.bf16.msra.mxu0 %v369
    %390 = vmatprep.subr.bf16.mxu0 0
    %391 = vmatpush1.bf16.msra.mxu0 %v370
    %392 = vmatprep.subr.bf16.mxu0 0
    %393 = vmatpush1.bf16.msra.mxu0 %v371
    %394 = vmatprep.subr.bf16.mxu0 0
    %395 = vmatpush1.bf16.msra.mxu0 %v372
    %396 = vmatprep.subr.bf16.mxu0 0
    %397 = vmatpush1.bf16.msra.mxu0 %v373
    %398 = vmatprep.subr.bf16.mxu0 0
    %399 = vmatpush1.bf16.msra.mxu0 0
    %400 = vmatprep.subr.bf16.mxu0 0
    %401 = vmatpush1.bf16.msra.mxu0 0
    %402 = vmatprep.subr.bf16.mxu0 0
    %403 = vmatpush1.bf16.msra.mxu0 0
    %404 = vmatprep.subr.bf16.mxu0 0
    %405 = vmatpush1.bf16.msra.mxu0 0
    %406 = vmatprep.subr.bf16.mxu0 0
    %407 = vmatpush1.bf16.msra.mxu0 0
    %408 = vmatprep.subr.bf16.mxu0 0
    %409 = vmatpush1.bf16.msra.mxu0 0
    %410 = vmatprep.subr.bf16.mxu0 0
    %411 = vmatpush1.bf16.msra.mxu0 0
    %412 = vmatprep.subr.bf16.mxu0 0
    %413 = vmatpush1.bf16.msra.mxu0 0
    %414 = vmatprep.mubr.bf16.mxu0 0
    %415 = vmatmul.mubr.bf16.gmra.mrb[0].mxu0 %v308
    %v416 = vpop.f32.mrb[0].mxu0
    %v417 = vadd.f32 %v332, %v416
    %v418 = vpop.f32.mrb[0].mxu0
    %v419 = vpop.f32.mrb[0].mxu0
    %v420 = vadd.f32 %v332, %v419
    %v421 = vpop.f32.mrb[0].mxu0
    %422 = vdwg.mxu0
    %v423 = vmax.f32 %v417, 0.0
    %v424 = vmax.f32 %v420, 0.0
    %v425 = vpack.c.bf16 %v424, %v423
    %s426 = scalar_lea.vmem [#allocation4], 128
    %v427 = vld [vmem:[%s426] sm:$0xf]
    %v428 = vld [vmem:[%s426 + $0x4] sm:$0xf]
    %v429 = vld [vmem:[%s426 + $0x8] sm:$0xf]
    %v430 = vld [vmem:[%s426 + $0xc] sm:$0xf]
    %v431 = vld [vmem:[%s426 + $0x10] sm:$0xf]
    %v432 = vld [vmem:[%s426 + $0x14] sm:$0xf]
    %v433 = vld [vmem:[%s426 + $0x18] sm:$0xf]
    %v434 = vld [vmem:[%s426 + $0x1c] sm:$0xf]
    %v435 = vld [vmem:[%s426 + $0x20] sm:$0xf]
    %v436 = vld [vmem:[%s426 + $0x24] sm:$0xf]
    %v437 = vld [vmem:[%s426 + $0x28] sm:$0xf]
    %v438 = vld [vmem:[%s426 + $0x2c] sm:$0xf]
    %v439 = vld [vmem:[%s426 + $0x30] sm:$0xf]
    %v440 = vld [vmem:[%s426 + $0x34] sm:$0xf]
    %v441 = vld [vmem:[%s426 + $0x38] sm:$0xf]
    %v442 = vld [vmem:[%s426 + $0x3c] sm:$0xf]
    %s443 = scalar_lea.vmem %s3, 3
    %v444 = vld [vmem:[%s443] sm:$0x1]
    %v446 = vlaneseq
    %v447 = vshrl.u32 %v446, 7
    %v448 = vsub.s32 0, %v447
    %v449 = vrot.slane %v444, %v448
    %v467 = vunpack.c.l.b16 %v427
    %v468 = vunpack.c.l.b16 %v428
    %v469 = vunpack.c.l.b16 %v429
    %v470 = vunpack.c.l.b16 %v430
    %v471 = vunpack.c.l.b16 %v431
    %v472 = vunpack.c.l.b16 %v432
    %v473 = vunpack.c.l.b16 %v433
    %v474 = vunpack.c.l.b16 %v434
    %v475 = vunpack.c.l.b16 %v435
    %v476 = vunpack.c.l.b16 %v436
    %v477 = vunpack.c.l.b16 %v437
    %v478 = vunpack.c.l.b16 %v438
    %v479 = vunpack.c.l.b16 %v439
    %v480 = vunpack.c.l.b16 %v440
    %v481 = vunpack.c.l.b16 %v441
    %v482 = vunpack.c.l.b16 %v442
    %v483 = vpack.c.b16 %v468, %v467
    %v484 = vpack.c.b16 %v470, %v469
    %v485 = vpack.c.b16 %v472, %v471
    %v486 = vpack.c.b16 %v474, %v473
    %v487 = vpack.c.b16 %v476, %v475
    %v488 = vpack.c.b16 %v478, %v477
    %v489 = vpack.c.b16 %v480, %v479
    %v490 = vpack.c.b16 %v482, %v481
    %499 = vmatprep.subr.bf16.mxu0 0
    %500 = vmatpush1.bf16.msra.mxu0 %v483
    %501 = vmatprep.subr.bf16.mxu0 0
    %502 = vmatpush1.bf16.msra.mxu0 %v484
    %503 = vmatprep.subr.bf16.mxu0 0
    %504 = vmatpush1.bf16.msra.mxu0 %v485
    %505 = vmatprep.subr.bf16.mxu0 0
    %506 = vmatpush1.bf16.msra.mxu0 %v486
    %507 = vmatprep.subr.bf16.mxu0 0
    %508 = vmatpush1.bf16.msra.mxu0 %v487
    %509 = vmatprep.subr.bf16.mxu0 0
    %510 = vmatpush1.bf16.msra.mxu0 %v488
    %511 = vmatprep.subr.bf16.mxu0 0
    %512 = vmatpush1.bf16.msra.mxu0 %v489
    %513 = vmatprep.subr.bf16.mxu0 0
    %514 = vmatpush1.bf16.msra.mxu0 %v490
    %515 = vmatprep.subr.bf16.mxu0 0
    %516 = vmatpush1.bf16.msra.mxu0 0
    %517 = vmatprep.subr.bf16.mxu0 0
    %518 = vmatpush1.bf16.msra.mxu0 0
    %519 = vmatprep.subr.bf16.mxu0 0
    %520 = vmatpush1.bf16.msra.mxu0 0
    %521 = vmatprep.subr.bf16.mxu0 0
    %522 = vmatpush1.bf16.msra.mxu0 0
    %523 = vmatprep.subr.bf16.mxu0 0
    %524 = vmatpush1.bf16.msra.mxu0 0
    %525 = vmatprep.subr.bf16.mxu0 0
    %526 = vmatpush1.bf16.msra.mxu0 0
    %527 = vmatprep.subr.bf16.mxu0 0
    %528 = vmatpush1.bf16.msra.mxu0 0
    %529 = vmatprep.subr.bf16.mxu0 0
    %530 = vmatpush1.bf16.msra.mxu0 0
    %531 = vmatprep.mubr.bf16.mxu0 0
    %532 = vmatmul.mubr.bf16.gmra.mrb[0].mxu0 %v425
    %v533 = vpop.f32.mrb[0].mxu0
    %v534 = vadd.f32 %v449, %v533
    %v535 = vpop.f32.mrb[0].mxu0
    %v536 = vpop.f32.mrb[0].mxu0
    %v537 = vadd.f32 %v449, %v536
    %v538 = vpop.f32.mrb[0].mxu0
    %539 = vdwg.mxu0
    %v540 = vpack.c.bf16 %v537, %v534
    %v542 = vcombine.high %v540, %v540
    %v544 = vunpack.c.l.s4 1966171168
    %v545 = vunpack.c.0.s8 %v544
    %v546 = vlaneseq
    %v547 = vshrl.u32 %v546, 7
    %v548 = vsub.s32 %v545, %v547
    %v549 = vrot.slane %v540, %v548
    %v551 = vunpack.c.l.s4 1966171168
    %v552 = vunpack.c.0.s8 %v551
    %v553 = vlaneseq
    %v554 = vshrl.u32 %v553, 7
    %v555 = vsub.s32 %v552, %v554
    %v556 = vrot.slane %v542, %v555
    %v557 = vcombine.high %v549, %v549
    %v558 = vcombine.high %v556, %v556
    %v560 = vunpack.c.l.s4 1966171168
    %v561 = vunpack.c.0.s8 %v560
    %v562 = vlaneseq
    %v563 = vshrl.u32 %v562, 7
    %v564 = vsub.s32 %v561, %v563
    %v565 = vrot.slane %v549, %v564
    %v567 = vunpack.c.l.s4 1966171168
    %v568 = vunpack.c.0.s8 %v567
    %v569 = vlaneseq
    %v570 = vshrl.u32 %v569, 7
    %v571 = vsub.s32 %v568, %v570
    %v572 = vrot.slane %v556, %v571
    %v574 = vunpack.c.l.s4 1966171168
    %v575 = vunpack.c.0.s8 %v574
    %v576 = vlaneseq
    %v577 = vshrl.u32 %v576, 7
    %v578 = vsub.s32 %v575, %v577
    %v579 = vrot.slane %v557, %v578
    %v581 = vunpack.c.l.s4 1966171168
    %v582 = vunpack.c.0.s8 %v581
    %v583 = vlaneseq
    %v584 = vshrl.u32 %v583, 7
    %v585 = vsub.s32 %v582, %v584
    %v586 = vrot.slane %v558, %v585
    %v587 = vcombine.high %v565, %v565
    %v588 = vcombine.high %v572, %v572
    %v589 = vcombine.high %v579, %v579
    %v590 = vcombine.high %v586, %v586
    %599 = vst [vmem:[#allocation6] sm:$0x1] %v565
    %600 = vst [vmem:[#allocation6 + $0x1] sm:$0x1] %v579
    %601 = vst [vmem:[#allocation6 + $0x2] sm:$0x1] %v587
    %602 = vst [vmem:[#allocation6 + $0x3] sm:$0x1] %v589
    %603 = vst [vmem:[#allocation6 + $0x4] sm:$0x1] %v572
    %604 = vst [vmem:[#allocation6 + $0x5] sm:$0x1] %v586
    %605 = vst [vmem:[#allocation6 + $0x6] sm:$0x1] %v588
    %606 = vst [vmem:[#allocation6 + $0x7] sm:$0x1] %v590
    // Predicated region
    $region26: #{style_mlp_forward.1} parent=1 // pred_check
      _
    $region27: #{style_mlp_forward.1} parent=1 // pred_check_branch
      %608 = sbr.rel (0) target = $region29
    $region28: #{style_mlp_forward.1} parent=1 // pred_region
      // Predicated region
      $region30: #{style_mlp_forward.1} parent=28 // pred_check
        _
      $region31: #{style_mlp_forward.1} parent=28 // pred_check_branch
        %610 = sbr.rel (0) target = $region33
      $region32: #{style_mlp_forward.1} parent=28 // pred_region
        // Predicated region
        $region34: #{style_mlp_forward.1} parent=32 // pred_check
          _
        $region35: #{style_mlp_forward.1} parent=32 // pred_check_branch
          %612 = sbr.rel target = $region37
        $region36: #{style_mlp_forward.1} parent=32 // pred_region
          // Predicated region
          $region49: #{style_mlp_forward.1} parent=36 // pred_check
            _
          $region50: #{style_mlp_forward.1} parent=36 // pred_check_branch
            %627 = sbr.rel (0) target = $region52
          $region51: #{style_mlp_forward.1} parent=36 // pred_region
            loop: start=0, step=1, limit=1
            $region53: #{style_mlp_forward.1} parent=51 // loop_pre_header
              _
            $region54: #{style_mlp_forward.1} parent=51 // loop_header
              %s630 = sphi 0, %s634
              %p631 = scmp.ge.s32.totalorder %s630, 1
              %s635 = sphi [#allocation6], [#allocation6]
              %s636 = sphi %s4, %s4
            $region55: #{style_mlp_forward.1} parent=51 // loop_header_branch
              %633 = sbr.rel (%p631) target = $region59
            $region56: #{style_mlp_forward.1} parent=51 // loop_body
              %v637 = vld [vmem:[%s635] sm:$0x1]
              %638 = vst [vmem:[%s636] sm:$0x1] %v637
            $region57: #{style_mlp_forward.1} parent=51 // loop_footer
              %s634 = sadd.s32 1, %s630
            $region58: #{style_mlp_forward.1} parent=51 // loop_footer_branch
              %629 = sbr.rel target = $region54
            $region59: #{style_mlp_forward.1} parent=51 // loop_exit
              _
          $region52: #{style_mlp_forward.1} parent=36 // pred_fallthru
            _
        $region37: #{style_mlp_forward.1} parent=32 // pred_fallthru
          _
        // Predicated region
        $region38: #{style_mlp_forward.1} parent=32 // pred_check
          _
        $region39: #{style_mlp_forward.1} parent=32 // pred_check_branch
          %614 = sbr.rel (0) target = $region41
        $region40: #{style_mlp_forward.1} parent=32 // pred_region
          loop: start=0, step=1, limit=1
          $region42: #{style_mlp_forward.1} parent=40 // loop_pre_header
            _
          $region43: #{style_mlp_forward.1} parent=40 // loop_header
            %s617 = sphi 0, %s621
            %p618 = scmp.ge.s32.totalorder %s617, 1
            %s622 = sphi [#allocation6], [#allocation6]
            %s623 = sphi %s4, %s4
          $region44: #{style_mlp_forward.1} parent=40 // loop_header_branch
            %620 = sbr.rel (%p618) target = $region48
          $region45: #{style_mlp_forward.1} parent=40 // loop_body
            %v624 = vld [vmem:[%s622] sm:$0x1]
            %625 = vst [vmem:[%s623] sm:$0x1] %v624
          $region46: #{style_mlp_forward.1} parent=40 // loop_footer
            %s621 = sadd.s32 1, %s617
          $region47: #{style_mlp_forward.1} parent=40 // loop_footer_branch
            %616 = sbr.rel target = $region43
          $region48: #{style_mlp_forward.1} parent=40 // loop_exit
            _
        $region41: #{style_mlp_forward.1} parent=32 // pred_fallthru
          _
      $region33: #{style_mlp_forward.1} parent=28 // pred_fallthru
        _
      %639 = vnop
    $region29: #{style_mlp_forward.1} parent=1 // pred_fallthru
      _
    // Predicated region
    $region60: #{style_mlp_forward.1} parent=1 // pred_check
      _
    $region61: #{style_mlp_forward.1} parent=1 // pred_check_branch
      %641 = sbr.rel (0) target = $region63
    $region62: #{style_mlp_forward.1} parent=1 // pred_region
      _
    $region63: #{style_mlp_forward.1} parent=1 // pred_fallthru
      _
    %642 = vsyncpa [#allocation3], 1
    %643 = vsyncpa [#allocation5], 1

</llo_original>
